<compile_context>
chip_gen: v7x
topology: tpu7x:2x2x1
jax: 0.10.0
libtpu: 0.0.40
codegen_flags: <defaults>
</compile_context>

<pallas_src>
import jax
import jax.numpy as jnp
from jax import lax
from jax.experimental import pallas as pl
from jax.experimental.pallas import tpu as pltpu


def make_down_kernel(TR, WP):
    """TR = pooled rows per output tile, WP = pooled width. Tile has TR+4 rows
    (2-row halo each side), flattened to TP = (TR+4)*WP lane-major pixels."""
    TP = (TR + 4) * WP

    def shift(src, s):
        # v[:, p] = src[:, p+s] if 0 <= p+s < TP else 0   (static s)
        if s == 0:
            return src
        pad = jnp.zeros((src.shape[0], abs(s)), src.dtype)
        if s > 0:
            return jnp.concatenate([src[:, s:], pad], axis=1)
        return jnp.concatenate([pad, src[:, :TP + s]], axis=1)

    def conv3x3_bias_relu(src, w_ref, b_ref, col_m1, col_p1):
        # src: (Ci, TP) bf16.  w_ref: (Co, 9*Ci) bf16, tap-major columns.
        # Build the K-stacked im2col source; the 8 tap accumulations happen
        # inside the single MXU matmul.
        parts = []
        for dy in (-1, 0, 1):
            for dx in (-1, 0, 1):
                v = shift(src, dy * WP + dx)
                if dx == -1:
                    v = v * col_m1        # kill row-wrap at column 0
                elif dx == 1:
                    v = v * col_p1        # kill row-wrap at column WP-1
                parts.append(v)
        stacked = jnp.concatenate(parts, axis=0)              # (9*Ci, TP) bf16
        z = jnp.dot(w_ref[...], stacked,
                    preferred_element_type=jnp.float32)       # (Co, TP) f32
        return jnp.maximum(z + b_ref[...], 0.0)

    def kernel(colmask_ref, rowmask_ref, x_ref, w1_ref, b1_ref, w2_ref, b2_ref,
               o_ref):
        # x_ref: (4, Ci_p, TP) bf16 -- the 4 positions of each 2x2 pool window.
        pooled = jnp.maximum(jnp.maximum(x_ref[0], x_ref[1]),
                             jnp.maximum(x_ref[2], x_ref[3]))  # (Ci_p, TP) bf16
        col_m1 = colmask_ref[0]                                # (1, TP) bf16
        col_p1 = colmask_ref[1]

        h1 = conv3x3_bias_relu(pooled, w1_ref, b1_ref, col_m1, col_p1)
        # Zero h1 at halo rows that lie outside the image: this is conv2's
        # zero padding at the top/bottom image border (only hits edge tiles).
        h1 = h1.astype(jnp.bfloat16) * rowmask_ref[...]        # (Cm_p, TP) bf16
        h2 = conv3x3_bias_relu(h1, w2_ref, b2_ref, col_m1, col_p1)

        # Write only the TR interior rows (drop the 2-row halo on each side).
        o_ref[...] = h2[:, 2 * WP:(TR + 2) * WP].astype(o_ref.dtype)

    return kernel


def _round_up(x, m):
    return ((x + m - 1) // m) * m


def _pick_row_tile(HP, WP, max_lanes=8192):
    # Largest divisor of HP whose output tile (TR*WP) is lane-dense (%128) and
    # not too large; fall back to the whole image (full-dim block is allowed).
    for tr in range(HP, 0, -1):
        if HP % tr == 0 and (tr * WP) % 128 == 0 and tr * WP <= max_lanes:
            return tr
    return HP


def down_forward(x_nchw, params, *, row_tile=None, out_dtype=jnp.float32):
    N, C_in, H, W = x_nchw.shape
    assert H % 2 == 0 and W % 2 == 0, "MaxPool2d(2) path assumes even H, W"
    HP, WP = H // 2, W // 2
    P = HP * WP

    w1, b1 = params["w1_eff"], params["b1_eff"]   # (3,3,C_in,C_mid), (C_mid,)
    w2, b2 = params["w2_eff"], params["b2_eff"]   # (3,3,C_mid,C_out), (C_out,)
    C_mid, C_out = w1.shape[-1], w2.shape[-1]

    # Pad channel dims to the bf16 sublane pack so the tap-stacked source is
    # always (16,128)-tile aligned.
    C_in_p = _round_up(C_in, 16)
    C_mid_p = _round_up(C_mid, 16)

    TR = _pick_row_tile(HP, WP) if row_tile is None else row_tile
    assert HP % TR == 0, "row_tile must divide the pooled height"
    T = HP // TR
    assert T == 1 or (TR * WP) % 128 == 0, \
        "output tile lane width must be a multiple of 128 (or the full image)"
    TP = (TR + 4) * WP

    # ---- input layout: NCHW -> (N, T, 4, Ci_p, TP) bf16 with 2-row halos ----
    x = x_nchw.astype(jnp.bfloat16).reshape(N, C_in, HP, 2, WP, 2)
    x = jnp.transpose(x, (0, 3, 5, 1, 2, 4)).reshape(N, 4, C_in, HP, WP)
    x = jnp.pad(x, ((0, 0), (0, 0), (0, C_in_p - C_in), (2, 2), (0, 0)))
    x_t = jnp.stack([x[:, :, :, t * TR:t * TR + TR + 4, :] for t in range(T)],
                    axis=1)                                   # (N,T,4,Ci_p,TR+4,WP)
    x_t = x_t.reshape(N, T, 4, C_in_p, TP)

    # ---- weights: BN-folded, channel-padded, tap-stacked on K, bf16 ----
    w1p = jnp.pad(w1, ((0, 0), (0, 0), (0, C_in_p - C_in), (0, C_mid_p - C_mid)))
    w1k = jnp.transpose(w1p.reshape(9, C_in_p, C_mid_p), (2, 0, 1))
    w1k = w1k.reshape(C_mid_p, 9 * C_in_p).astype(jnp.bfloat16)
    b1k = jnp.pad(b1, (0, C_mid_p - C_mid)).reshape(C_mid_p, 1).astype(jnp.float32)

    w2p = jnp.pad(w2, ((0, 0), (0, 0), (0, C_mid_p - C_mid), (0, 0)))
    w2k = jnp.transpose(w2p.reshape(9, C_mid_p, C_out), (2, 0, 1))
    w2k = w2k.reshape(C_out, 9 * C_mid_p).astype(jnp.bfloat16)
    b2k = b2.reshape(C_out, 1).astype(jnp.float32)

    # ---- masks (pre-thresholded 0/1, bf16) ----
    pix = jnp.arange(TP, dtype=jnp.int32)
    col = pix % WP
    row = pix // WP
    colmask = jnp.stack([(col > 0), (col < WP - 1)]).astype(jnp.bfloat16)
    colmask = colmask.reshape(2, 1, TP)
    rowmask = jnp.stack(
        [((row + t * TR - 2 >= 0) & (row + t * TR - 2 < HP)) for t in range(T)]
    ).astype(jnp.bfloat16).reshape(T, 1, TP)

    kernel = make_down_kernel(TR, WP)
    out = pl.pallas_call(
        kernel,
        out_shape=jax.ShapeDtypeStruct((N, C_out, P), out_dtype),
        grid_spec=pltpu.PrefetchScalarGridSpec(
            num_scalar_prefetch=0,
            grid=(N, T),
            in_specs=[
                pl.BlockSpec((2, 1, TP), lambda n, t: (0, 0, 0)),        # col masks
                pl.BlockSpec((None, 1, TP), lambda n, t: (t, 0, 0)),     # row mask
                pl.BlockSpec((None, None, 4, C_in_p, TP),
                             lambda n, t: (n, t, 0, 0, 0)),              # input tile
                pl.BlockSpec((C_mid_p, 9 * C_in_p), lambda n, t: (0, 0)),  # conv1 W
                pl.BlockSpec((C_mid_p, 1), lambda n, t: (0, 0)),           # conv1 b
                pl.BlockSpec((C_out, 9 * C_mid_p), lambda n, t: (0, 0)),   # conv2 W
                pl.BlockSpec((C_out, 1), lambda n, t: (0, 0)),             # conv2 b
            ],
            out_specs=pl.BlockSpec((None, C_out, TR * WP),
                                   lambda n, t: (n, 0, t)),
        ),
        compiler_params=pltpu.CompilerParams(
            dimension_semantics=("parallel", "parallel")),  # batch & pixel tiles
    )(colmask, rowmask, x_t, w1k, b1k, w2k, b2k)

    return out.reshape(N, C_out, HP, WP)


def init_params(key, c_in, c_out, eps=1e-5):
    c_mid = c_out  # DoubleConv default: mid_channels = out_channels
    ks = jax.random.split(key, 12)

    def layer(kw, kb, kg, kbe, km, kv, ci, co):
        w = jax.random.normal(kw, (3, 3, ci, co), jnp.float32) * 0.2   # HWIO
        b = jax.random.normal(kb, (co,), jnp.float32) * 0.1
        g = jax.random.uniform(kg, (co,), jnp.float32, 0.5, 1.5)
        be = jax.random.normal(kbe, (co,), jnp.float32) * 0.1
        m = jax.random.normal(km, (co,), jnp.float32) * 0.1
        v = jax.random.uniform(kv, (co,), jnp.float32, 0.5, 1.5)
        scale = g / jnp.sqrt(v + eps)
        w_eff = w * scale
        b_eff = b * scale + be - m * scale
        return dict(w=w, b=b, gamma=g, beta=be, mean=m, var=v,
                    w_eff=w_eff, b_eff=b_eff)

    l1 = layer(*ks[0:6], c_in, c_mid)
    l2 = layer(*ks[6:12], c_mid, c_out)
    return dict(
        l1=l1, l2=l2,
        w1_eff=l1["w_eff"], b1_eff=l1["b_eff"],
        w2_eff=l2["w_eff"], b2_eff=l2["b_eff"],
        eps=eps,
    )


def down_reference(x_nchw, params):
    """Pure-JAX reference: MaxPool2d(2) then (conv3x3 -> eval-BN -> ReLU) x 2."""
    eps = params["eps"]
    x = jnp.transpose(x_nchw, (0, 2, 3, 1))                       # NHWC
    x = lax.reduce_window(x, -jnp.inf, lax.max,
                          (1, 2, 2, 1), (1, 2, 2, 1), "VALID")

    def conv_bn_relu(h, layer):
        y = lax.conv_general_dilated(
            h, layer["w"], (1, 1), "SAME",
            dimension_numbers=("NHWC", "HWIO", "NHWC"),
            precision=lax.Precision.HIGHEST) + layer["b"]
        y = (y - layer["mean"]) / jnp.sqrt(layer["var"] + eps) * layer["gamma"] + layer["beta"]
        return jnp.maximum(y, 0.0)

    h = conv_bn_relu(x, params["l1"])
    h = conv_bn_relu(h, params["l2"])
    return jnp.transpose(h, (0, 3, 1, 2))                         # NCHW


if __name__ == "__main__":
    key = jax.random.PRNGKey(0)
    kx, kp = jax.random.split(key)

    N, C_IN, C_OUT, H, W = 2, 4, 8, 32, 32   # pooled image 16x16
    x = jax.random.normal(kx, (N, C_IN, H, W), jnp.float32)
    params = init_params(kp, C_IN, C_OUT)

    # row_tile=8 -> 2 pixel tiles of 8x16 = 128 lanes each; exercises the
    # halo / multi-tile path as well as the batch axis.
    y = down_forward(x, params, row_tile=8)
    y = jax.block_until_ready(y)
    assert y.shape == (N, C_OUT, H // 2, W // 2), y.shape

    y_ref = down_reference(x, params)
    max_err = float(jnp.max(jnp.abs(y - y_ref)))
    ref_scale = float(jnp.max(jnp.abs(y_ref))) + 1e-6
    # bf16 activations + bf16 single-pass MXU vs an f32 HIGHEST reference:
    # allow a few percent of full scale.
    if max_err > 4e-2 * ref_scale:
        raise AssertionError(
            f"Pallas output mismatch vs reference: max abs err = {max_err}, "
            f"ref scale = {ref_scale}")

    print("KERNEL_OK")
</pallas_src>

<mosaic_0001>
module attributes {stable_mosaic.version = 11 : i64} {
  func.func @kernel(%arg0: i32, %arg1: i32, %arg2: memref<2x1x192xbf16, #tpu.memory_space<vmem>>, %arg3: memref<1x1x192xbf16, #tpu.memory_space<vmem>>, %arg4: memref<1x1x4x16x192xbf16, #tpu.memory_space<vmem>>, %arg5: memref<16x144xbf16, #tpu.memory_space<vmem>>, %arg6: memref<16x1xf32, #tpu.memory_space<vmem>>, %arg7: memref<8x144xbf16, #tpu.memory_space<vmem>>, %arg8: memref<8x1xf32, #tpu.memory_space<vmem>>, %arg9: memref<1x8x128xf32, #tpu.memory_space<vmem>>) attributes {dimension_semantics = [#tpu.dimension_semantics<parallel>, #tpu.dimension_semantics<parallel>], iteration_bounds = array<i64: 2, 2>, scalar_prefetch = 0 : i64, scratch_operands = 0 : i64, tpu.core_type = #tpu.core_type<tc>, window_params = [{pipeline_mode = #tpu.pipeline_mode<synchronous>, transform_indices = @transform_0, window_bounds = array<i64: 2, 1, 192>}, {transform_indices = @transform_1, window_bounds = array<i64: 1, 1, 192>}, {transform_indices = @transform_2, window_bounds = array<i64: 1, 1, 4, 16, 192>}, {pipeline_mode = #tpu.pipeline_mode<synchronous>, transform_indices = @transform_3, window_bounds = array<i64: 16, 144>}, {pipeline_mode = #tpu.pipeline_mode<synchronous>, transform_indices = @transform_4, window_bounds = array<i64: 16, 1>}, {pipeline_mode = #tpu.pipeline_mode<synchronous>, transform_indices = @transform_5, window_bounds = array<i64: 8, 144>}, {pipeline_mode = #tpu.pipeline_mode<synchronous>, transform_indices = @transform_6, window_bounds = array<i64: 8, 1>}, {transform_indices = @transform_7, window_bounds = array<i64: 1, 8, 128>}]} {
    %c0 = arith.constant 0 : index
    %c0_0 = arith.constant 0 : index
    %c0_1 = arith.constant 0 : index
    %c0_2 = arith.constant 0 : index
    %c0_3 = arith.constant 0 : index
    %0 = vector.load %arg4[%c0, %c0_0, %c0_1, %c0_2, %c0_3] : memref<1x1x4x16x192xbf16, #tpu.memory_space<vmem>>, vector<1x1x1x16x192xbf16>
    %1 = vector.shape_cast %0 : vector<1x1x1x16x192xbf16> to vector<16x192xbf16>
    %c0_4 = arith.constant 0 : index
    %c0_5 = arith.constant 0 : index
    %c1 = arith.constant 1 : index
    %c0_6 = arith.constant 0 : index
    %c0_7 = arith.constant 0 : index
    %2 = vector.load %arg4[%c0_4, %c0_5, %c1, %c0_6, %c0_7] : memref<1x1x4x16x192xbf16, #tpu.memory_space<vmem>>, vector<1x1x1x16x192xbf16>
    %3 = vector.shape_cast %2 : vector<1x1x1x16x192xbf16> to vector<16x192xbf16>
    %4 = arith.maximumf %1, %3 : vector<16x192xbf16>
    %c0_8 = arith.constant 0 : index
    %c0_9 = arith.constant 0 : index
    %c2 = arith.constant 2 : index
    %c0_10 = arith.constant 0 : index
    %c0_11 = arith.constant 0 : index
    %5 = vector.load %arg4[%c0_8, %c0_9, %c2, %c0_10, %c0_11] : memref<1x1x4x16x192xbf16, #tpu.memory_space<vmem>>, vector<1x1x1x16x192xbf16>
    %6 = vector.shape_cast %5 : vector<1x1x1x16x192xbf16> to vector<16x192xbf16>
    %c0_12 = arith.constant 0 : index
    %c0_13 = arith.constant 0 : index
    %c3 = arith.constant 3 : index
    %c0_14 = arith.constant 0 : index
    %c0_15 = arith.constant 0 : index
    %7 = vector.load %arg4[%c0_12, %c0_13, %c3, %c0_14, %c0_15] : memref<1x1x4x16x192xbf16, #tpu.memory_space<vmem>>, vector<1x1x1x16x192xbf16>
    %8 = vector.shape_cast %7 : vector<1x1x1x16x192xbf16> to vector<16x192xbf16>
    %9 = arith.maximumf %6, %8 : vector<16x192xbf16>
    %10 = arith.maximumf %4, %9 : vector<16x192xbf16>
    %c0_16 = arith.constant 0 : index
    %c0_17 = arith.constant 0 : index
    %c0_18 = arith.constant 0 : index
    %11 = vector.load %arg2[%c0_16, %c0_17, %c0_18] : memref<2x1x192xbf16, #tpu.memory_space<vmem>>, vector<1x1x192xbf16>
    %12 = vector.shape_cast %11 : vector<1x1x192xbf16> to vector<1x192xbf16>
    %c1_19 = arith.constant 1 : index
    %c0_20 = arith.constant 0 : index
    %c0_21 = arith.constant 0 : index
    %13 = vector.load %arg2[%c1_19, %c0_20, %c0_21] : memref<2x1x192xbf16, #tpu.memory_space<vmem>>, vector<1x1x192xbf16>
    %14 = vector.shape_cast %13 : vector<1x1x192xbf16> to vector<1x192xbf16>
    %cst = arith.constant 0.000000e+00 : bf16
    %15 = vector.broadcast %cst : bf16 to vector<16x17xbf16>
    %16 = vector.extract_strided_slice %10 {offsets = [0, 0], sizes = [16, 175], strides = [1, 1]} : vector<16x192xbf16> to vector<16x175xbf16>
    %17 = tpu.concatenate %15, %16 in 1 : vector<16x17xbf16>, vector<16x175xbf16> -> vector<16x192xbf16>
    %18 = vector.broadcast %12 : vector<1x192xbf16> to vector<16x192xbf16>
    %19 = arith.mulf %17, %18 : vector<16x192xbf16>
    %cst_22 = arith.constant 0.000000e+00 : bf16
    %20 = vector.broadcast %cst_22 : bf16 to vector<16x16xbf16>
    %21 = vector.extract_strided_slice %10 {offsets = [0, 0], sizes = [16, 176], strides = [1, 1]} : vector<16x192xbf16> to vector<16x176xbf16>
    %22 = tpu.concatenate %20, %21 in 1 : vector<16x16xbf16>, vector<16x176xbf16> -> vector<16x192xbf16>
    %cst_23 = arith.constant 0.000000e+00 : bf16
    %23 = vector.broadcast %cst_23 : bf16 to vector<16x15xbf16>
    %24 = vector.extract_strided_slice %10 {offsets = [0, 0], sizes = [16, 177], strides = [1, 1]} : vector<16x192xbf16> to vector<16x177xbf16>
    %25 = tpu.concatenate %23, %24 in 1 : vector<16x15xbf16>, vector<16x177xbf16> -> vector<16x192xbf16>
    %26 = vector.broadcast %14 : vector<1x192xbf16> to vector<16x192xbf16>
    %27 = arith.mulf %25, %26 : vector<16x192xbf16>
    %cst_24 = arith.constant 0.000000e+00 : bf16
    %28 = vector.broadcast %cst_24 : bf16 to vector<16x1xbf16>
    %29 = vector.extract_strided_slice %10 {offsets = [0, 0], sizes = [16, 191], strides = [1, 1]} : vector<16x192xbf16> to vector<16x191xbf16>
    %30 = tpu.concatenate %28, %29 in 1 : vector<16x1xbf16>, vector<16x191xbf16> -> vector<16x192xbf16>
    %31 = vector.broadcast %12 : vector<1x192xbf16> to vector<16x192xbf16>
    %32 = arith.mulf %30, %31 : vector<16x192xbf16>
    %cst_25 = arith.constant 0.000000e+00 : bf16
    %33 = vector.broadcast %cst_25 : bf16 to vector<16x1xbf16>
    %34 = vector.extract_strided_slice %10 {offsets = [0, 1], sizes = [16, 191], strides = [1, 1]} : vector<16x192xbf16> to vector<16x191xbf16>
    %35 = tpu.concatenate %34, %33 in 1 : vector<16x191xbf16>, vector<16x1xbf16> -> vector<16x192xbf16>
    %36 = vector.broadcast %14 : vector<1x192xbf16> to vector<16x192xbf16>
    %37 = arith.mulf %35, %36 : vector<16x192xbf16>
    %cst_26 = arith.constant 0.000000e+00 : bf16
    %38 = vector.broadcast %cst_26 : bf16 to vector<16x15xbf16>
    %39 = vector.extract_strided_slice %10 {offsets = [0, 15], sizes = [16, 177], strides = [1, 1]} : vector<16x192xbf16> to vector<16x177xbf16>
    %40 = tpu.concatenate %39, %38 in 1 : vector<16x177xbf16>, vector<16x15xbf16> -> vector<16x192xbf16>
    %41 = vector.broadcast %12 : vector<1x192xbf16> to vector<16x192xbf16>
    %42 = arith.mulf %40, %41 : vector<16x192xbf16>
    %cst_27 = arith.constant 0.000000e+00 : bf16
    %43 = vector.broadcast %cst_27 : bf16 to vector<16x16xbf16>
    %44 = vector.extract_strided_slice %10 {offsets = [0, 16], sizes = [16, 176], strides = [1, 1]} : vector<16x192xbf16> to vector<16x176xbf16>
    %45 = tpu.concatenate %44, %43 in 1 : vector<16x176xbf16>, vector<16x16xbf16> -> vector<16x192xbf16>
    %cst_28 = arith.constant 0.000000e+00 : bf16
    %46 = vector.broadcast %cst_28 : bf16 to vector<16x17xbf16>
    %47 = vector.extract_strided_slice %10 {offsets = [0, 17], sizes = [16, 175], strides = [1, 1]} : vector<16x192xbf16> to vector<16x175xbf16>
    %48 = tpu.concatenate %47, %46 in 1 : vector<16x175xbf16>, vector<16x17xbf16> -> vector<16x192xbf16>
    %49 = vector.broadcast %14 : vector<1x192xbf16> to vector<16x192xbf16>
    %50 = arith.mulf %48, %49 : vector<16x192xbf16>
    %51 = tpu.concatenate %19, %22, %27, %32, %10, %37, %42, %45, %50 in 0 : vector<16x192xbf16>, vector<16x192xbf16>, vector<16x192xbf16>, vector<16x192xbf16>, vector<16x192xbf16>, vector<16x192xbf16>, vector<16x192xbf16>, vector<16x192xbf16>, vector<16x192xbf16> -> vector<144x192xbf16>
    %c0_29 = arith.constant 0 : index
    %c0_30 = arith.constant 0 : index
    %52 = vector.load %arg5[%c0_29, %c0_30] : memref<16x144xbf16, #tpu.memory_space<vmem>>, vector<16x144xbf16>
    %cst_31 = arith.constant dense<0.000000e+00> : vector<16x192xf32>
    %53 = tpu.matmul %52, %51, %cst_31 {dimension_numbers = #tpu.dot_dimension_numbers<[1], [0], [0], [1], [0, 0, 1, 1], [], []>} : vector<16x144xbf16>, vector<144x192xbf16>, vector<16x192xf32> -> vector<16x192xf32>
    %c0_32 = arith.constant 0 : index
    %c0_33 = arith.constant 0 : index
    %54 = vector.load %arg6[%c0_32, %c0_33] : memref<16x1xf32, #tpu.memory_space<vmem>>, vector<16x1xf32>
    %55 = vector.broadcast %54 : vector<16x1xf32> to vector<16x192xf32>
    %56 = arith.addf %53, %55 : vector<16x192xf32>
    %cst_34 = arith.constant 0.000000e+00 : f32
    %57 = vector.broadcast %cst_34 : f32 to vector<16x192xf32>
    %58 = arith.maximumf %56, %57 : vector<16x192xf32>
    %59 = arith.truncf %58 : vector<16x192xf32> to vector<16x192xbf16>
    %c0_35 = arith.constant 0 : index
    %c0_36 = arith.constant 0 : index
    %c0_37 = arith.constant 0 : index
    %60 = vector.load %arg3[%c0_35, %c0_36, %c0_37] : memref<1x1x192xbf16, #tpu.memory_space<vmem>>, vector<1x1x192xbf16>
    %61 = vector.shape_cast %60 : vector<1x1x192xbf16> to vector<1x192xbf16>
    %62 = vector.broadcast %61 : vector<1x192xbf16> to vector<16x192xbf16>
    %63 = arith.mulf %59, %62 : vector<16x192xbf16>
    %cst_38 = arith.constant 0.000000e+00 : bf16
    %64 = vector.broadcast %cst_38 : bf16 to vector<16x17xbf16>
    %65 = vector.extract_strided_slice %63 {offsets = [0, 0], sizes = [16, 175], strides = [1, 1]} : vector<16x192xbf16> to vector<16x175xbf16>
    %66 = tpu.concatenate %64, %65 in 1 : vector<16x17xbf16>, vector<16x175xbf16> -> vector<16x192xbf16>
    %67 = vector.broadcast %12 : vector<1x192xbf16> to vector<16x192xbf16>
    %68 = arith.mulf %66, %67 : vector<16x192xbf16>
    %cst_39 = arith.constant 0.000000e+00 : bf16
    %69 = vector.broadcast %cst_39 : bf16 to vector<16x16xbf16>
    %70 = vector.extract_strided_slice %63 {offsets = [0, 0], sizes = [16, 176], strides = [1, 1]} : vector<16x192xbf16> to vector<16x176xbf16>
    %71 = tpu.concatenate %69, %70 in 1 : vector<16x16xbf16>, vector<16x176xbf16> -> vector<16x192xbf16>
    %cst_40 = arith.constant 0.000000e+00 : bf16
    %72 = vector.broadcast %cst_40 : bf16 to vector<16x15xbf16>
    %73 = vector.extract_strided_slice %63 {offsets = [0, 0], sizes = [16, 177], strides = [1, 1]} : vector<16x192xbf16> to vector<16x177xbf16>
    %74 = tpu.concatenate %72, %73 in 1 : vector<16x15xbf16>, vector<16x177xbf16> -> vector<16x192xbf16>
    %75 = vector.broadcast %14 : vector<1x192xbf16> to vector<16x192xbf16>
    %76 = arith.mulf %74, %75 : vector<16x192xbf16>
    %cst_41 = arith.constant 0.000000e+00 : bf16
    %77 = vector.broadcast %cst_41 : bf16 to vector<16x1xbf16>
    %78 = vector.extract_strided_slice %63 {offsets = [0, 0], sizes = [16, 191], strides = [1, 1]} : vector<16x192xbf16> to vector<16x191xbf16>
    %79 = tpu.concatenate %77, %78 in 1 : vector<16x1xbf16>, vector<16x191xbf16> -> vector<16x192xbf16>
    %80 = vector.broadcast %12 : vector<1x192xbf16> to vector<16x192xbf16>
    %81 = arith.mulf %79, %80 : vector<16x192xbf16>
    %cst_42 = arith.constant 0.000000e+00 : bf16
    %82 = vector.broadcast %cst_42 : bf16 to vector<16x1xbf16>
    %83 = vector.extract_strided_slice %63 {offsets = [0, 1], sizes = [16, 191], strides = [1, 1]} : vector<16x192xbf16> to vector<16x191xbf16>
    %84 = tpu.concatenate %83, %82 in 1 : vector<16x191xbf16>, vector<16x1xbf16> -> vector<16x192xbf16>
    %85 = vector.broadcast %14 : vector<1x192xbf16> to vector<16x192xbf16>
    %86 = arith.mulf %84, %85 : vector<16x192xbf16>
    %cst_43 = arith.constant 0.000000e+00 : bf16
    %87 = vector.broadcast %cst_43 : bf16 to vector<16x15xbf16>
    %88 = vector.extract_strided_slice %63 {offsets = [0, 15], sizes = [16, 177], strides = [1, 1]} : vector<16x192xbf16> to vector<16x177xbf16>
    %89 = tpu.concatenate %88, %87 in 1 : vector<16x177xbf16>, vector<16x15xbf16> -> vector<16x192xbf16>
    %90 = vector.broadcast %12 : vector<1x192xbf16> to vector<16x192xbf16>
    %91 = arith.mulf %89, %90 : vector<16x192xbf16>
    %cst_44 = arith.constant 0.000000e+00 : bf16
    %92 = vector.broadcast %cst_44 : bf16 to vector<16x16xbf16>
    %93 = vector.extract_strided_slice %63 {offsets = [0, 16], sizes = [16, 176], strides = [1, 1]} : vector<16x192xbf16> to vector<16x176xbf16>
    %94 = tpu.concatenate %93, %92 in 1 : vector<16x176xbf16>, vector<16x16xbf16> -> vector<16x192xbf16>
    %cst_45 = arith.constant 0.000000e+00 : bf16
    %95 = vector.broadcast %cst_45 : bf16 to vector<16x17xbf16>
    %96 = vector.extract_strided_slice %63 {offsets = [0, 17], sizes = [16, 175], strides = [1, 1]} : vector<16x192xbf16> to vector<16x175xbf16>
    %97 = tpu.concatenate %96, %95 in 1 : vector<16x175xbf16>, vector<16x17xbf16> -> vector<16x192xbf16>
    %98 = vector.broadcast %14 : vector<1x192xbf16> to vector<16x192xbf16>
    %99 = arith.mulf %97, %98 : vector<16x192xbf16>
    %100 = tpu.concatenate %68, %71, %76, %81, %63, %86, %91, %94, %99 in 0 : vector<16x192xbf16>, vector<16x192xbf16>, vector<16x192xbf16>, vector<16x192xbf16>, vector<16x192xbf16>, vector<16x192xbf16>, vector<16x192xbf16>, vector<16x192xbf16>, vector<16x192xbf16> -> vector<144x192xbf16>
    %c0_46 = arith.constant 0 : index
    %c0_47 = arith.constant 0 : index
    %101 = vector.load %arg7[%c0_46, %c0_47] : memref<8x144xbf16, #tpu.memory_space<vmem>>, vector<8x144xbf16>
    %cst_48 = arith.constant dense<0.000000e+00> : vector<8x192xf32>
    %102 = tpu.matmul %101, %100, %cst_48 {dimension_numbers = #tpu.dot_dimension_numbers<[1], [0], [0], [1], [0, 0, 1, 1], [], []>} : vector<8x144xbf16>, vector<144x192xbf16>, vector<8x192xf32> -> vector<8x192xf32>
    %c0_49 = arith.constant 0 : index
    %c0_50 = arith.constant 0 : index
    %103 = vector.load %arg8[%c0_49, %c0_50] : memref<8x1xf32, #tpu.memory_space<vmem>>, vector<8x1xf32>
    %104 = vector.broadcast %103 : vector<8x1xf32> to vector<8x192xf32>
    %105 = arith.addf %102, %104 : vector<8x192xf32>
    %cst_51 = arith.constant 0.000000e+00 : f32
    %106 = vector.broadcast %cst_51 : f32 to vector<8x192xf32>
    %107 = arith.maximumf %105, %106 : vector<8x192xf32>
    %108 = vector.extract_strided_slice %107 {offsets = [0, 32], sizes = [8, 128], strides = [1, 1]} : vector<8x192xf32> to vector<8x128xf32>
    %c0_52 = arith.constant 0 : index
    %c0_53 = arith.constant 0 : index
    %c0_54 = arith.constant 0 : index
    %109 = vector.load %arg9[%c0_52, %c0_53, %c0_54] : memref<1x8x128xf32, #tpu.memory_space<vmem>>, vector<1x8x128xf32>
    %110 = vector.shape_cast %109 : vector<1x8x128xf32> to vector<8x128xf32>
    %111 = vector.shape_cast %108 : vector<8x128xf32> to vector<1x8x128xf32>
    tpu.vector_store %arg9[%c0_52, %c0_53, %c0_54], %111 {strides = array<i32>} : memref<1x8x128xf32, #tpu.memory_space<vmem>>, vector<1x8x128xf32>,
    return
  }
  func.func @transform_0(%arg0: i32, %arg1: i32) -> (i32, i32, i32) {
    %c0_i32 = arith.constant 0 : i32
    %c0_i32_0 = arith.constant 0 : i32
    %c0_i32_1 = arith.constant 0 : i32
    %c0_i32_2 = arith.constant 0 : i32
    return %c0_i32, %c0_i32_0, %c0_i32_1 : i32, i32, i32
  }
  func.func @transform_1(%arg0: i32, %arg1: i32) -> (i32, i32, i32) {
    %c0_i32 = arith.constant 0 : i32
    %c0_i32_0 = arith.constant 0 : i32
    %c0_i32_1 = arith.constant 0 : i32
    return %arg1, %c0_i32, %c0_i32_0 : i32, i32, i32
  }
  func.func @transform_2(%arg0: i32, %arg1: i32) -> (i32, i32, i32, i32, i32) {
    %c0_i32 = arith.constant 0 : i32
    %c0_i32_0 = arith.constant 0 : i32
    %c0_i32_1 = arith.constant 0 : i32
    %c0_i32_2 = arith.constant 0 : i32
    return %arg0, %arg1, %c0_i32, %c0_i32_0, %c0_i32_1 : i32, i32, i32, i32, i32
  }
  func.func @transform_3(%arg0: i32, %arg1: i32) -> (i32, i32) {
    %c0_i32 = arith.constant 0 : i32
    %c0_i32_0 = arith.constant 0 : i32
    %c0_i32_1 = arith.constant 0 : i32
    return %c0_i32, %c0_i32_0 : i32, i32
  }
  func.func @transform_4(%arg0: i32, %arg1: i32) -> (i32, i32) {
    %c0_i32 = arith.constant 0 : i32
    %c0_i32_0 = arith.constant 0 : i32
    %c0_i32_1 = arith.constant 0 : i32
    return %c0_i32, %c0_i32_0 : i32, i32
  }
  func.func @transform_5(%arg0: i32, %arg1: i32) -> (i32, i32) {
    %c0_i32 = arith.constant 0 : i32
    %c0_i32_0 = arith.constant 0 : i32
    %c0_i32_1 = arith.constant 0 : i32
    return %c0_i32, %c0_i32_0 : i32, i32
  }
  func.func @transform_6(%arg0: i32, %arg1: i32) -> (i32, i32) {
    %c0_i32 = arith.constant 0 : i32
    %c0_i32_0 = arith.constant 0 : i32
    %c0_i32_1 = arith.constant 0 : i32
    return %c0_i32, %c0_i32_0 : i32, i32
  }
  func.func @transform_7(%arg0: i32, %arg1: i32) -> (i32, i32, i32) {
    %c0_i32 = arith.constant 0 : i32
    %c0_i32_0 = arith.constant 0 : i32
    return %arg0, %c0_i32, %arg1 : i32, i32, i32
  }
}

</mosaic_0001>

<llo_original>
// kernel: tpu_custom_call.1
$region0: #{tpu_custom_call.1}
  #allocation0 [shape = 'u32[]', space=smem, size = 0x4, offset = 0x4, fixed_abs, tag = 'smem constant byte address 0x4 - core index']
  #allocation1 [shape = 'u32[144,128]{1,0:T(1,128)}', space=vmem, size = 0x12000, scoped, tag = 'internal scratch']
  %s0 = inlined_call_operand.vmem [shape: bf16[2,1,192], index: 0, kind: input, shape index: {}]
  %s1 = inlined_call_operand.vmem [shape: bf16[2,1,192], index: 1, kind: input, shape index: {}]
  %s2 = inlined_call_operand.hbm [shape: bf16[2,2,4,16,192], index: 2, kind: input, shape index: {}]
  %s3 = inlined_call_operand.vmem [shape: bf16[16,144], index: 3, kind: input, shape index: {}]
  %s4 = inlined_call_operand.vmem [shape: f32[16,1], index: 4, kind: input, shape index: {}]
  %s5 = inlined_call_operand.vmem [shape: bf16[8,144], index: 5, kind: input, shape index: {}]
  %s6 = inlined_call_operand.vmem [shape: f32[8,1], index: 6, kind: input, shape index: {}]
  %s7 = inlined_call_operand.hbm [shape: f32[2,8,256], index: 7, kind: output, shape index: {}]
  %s8 = sld [smem:[#allocation0]]
  $region65: #{tpu_custom_call.1} parent=0
    _
  %s10 = ssub.s32 1, %s8
  %s11 = scalar_select 0, %s10, %s8
  $region1: #{tpu_custom_call.1} parent=0
    #allocation2 [shape = 'u8[65536]{0}', space=vmem, size = 0x10000, scoped, tag = 'input window, operand 2']
    #allocation3 [shape = 's32[2]{0}', space=sflag, size = 0x8, scoped, tag = 'scoped memory for tpu_custom_call.1']
    #allocation4 [shape = 's32[2]{0}', space=sflag, size = 0x8, scoped, tag = 'scoped memory for tpu_custom_call.1']
    #allocation5 [shape = 'u8[8192]{0}', space=vmem, size = 0x2000, scoped, tag = 'output window, operand 0']
    %12 = vsyncpa [#allocation3], 0
    %s13 = scalar_lea.sflag [#allocation3], 1
    %14 = vsyncpa %s13, 0
    %15 = vsyncpa [#allocation4], 0
    %s16 = scalar_lea.sflag [#allocation4], 1
    %17 = vsyncpa %s16, 0
    loop: start=0, step=1, limit=6
    $region2: #{tpu_custom_call.1} parent=1 // loop_pre_header
      _
    $region3: #{tpu_custom_call.1} parent=1 // loop_header
      %s19 = sphi 0, %s23
      %p20 = scmp.ge.s32.totalorder %s19, 6
      %s26 = sphi 0, %s38
      %s27 = sphi 0, %s34
      %s28 = sphi 0, %s26
      %s29 = sphi 0, %s27
      %s30 = sphi 0, %s28
      %s31 = sphi 0, %s29
      %s39 = sphi 0, %s39
      %s41 = sphi 0, %s39
      %s42 = sphi 0, %s41
      %s56 = sphi 0, %s42
      %s62 = sphi 0, %s64
      %s65 = sphi 0, %s62
      %s66 = sphi 0, %s65
      %s82 = sphi 0, %s66
      %s90 = sphi 0, %s92
      %s93 = sphi 0, %s90
      %s94 = sphi 0, %s93
      %s110 = sphi 0, %s94
      %s114 = sphi 0, %s114
      %s116 = sphi 0, %s114
      %s117 = sphi 0, %s116
      %s131 = sphi 0, %s117
      %s135 = sphi 0, %s135
      %s137 = sphi 0, %s135
      %s138 = sphi 0, %s137
      %s152 = sphi 0, %s138
      %s156 = sphi 0, %s156
      %s158 = sphi 0, %s156
      %s159 = sphi 0, %s158
      %s173 = sphi 0, %s159
      %s177 = sphi 0, %s177
      %s179 = sphi 0, %s177
      %s180 = sphi 0, %s179
      %s194 = sphi 0, %s180
      %s202 = sphi 0, %s204
      %s205 = sphi 0, %s202
      %s206 = sphi 0, %s205
      %s222 = sphi 0, %s206
    $region4: #{tpu_custom_call.1} parent=1 // loop_header_branch
      %22 = sbr.rel (%p20) target = $region8
    $region5: #{tpu_custom_call.1} parent=1 // loop_body
      %s24 = ssub.s32 %s19, 1
      %s25 = ssub.s32 %s19, 2
      %s32 = sadd.s32 1, %s27
      %p33 = scmp.ge.s32.totalorder %s32, 2
      %s34 = scalar_select %p33, 0, %s32
      %s35 = sadd.s32 1, %s26
      %s36 = scalar_select %p33, %s35, %s26
      %p37 = scmp.ge.s32.totalorder %s36, 2
      %s38 = scalar_select %p37, 0, %s36
      %s40 = sadd.s32 %s39, 1
      %p43 = scmp.eq.s32.totalorder %s19, 3
      %p44 = scmp.ne.s32.totalorder %s39, %s41
      %p45 = scmp.eq.s32.totalorder %s19, 0
      %p46 = por %p44, %p45
      %p47 = scmp.ne.s32.totalorder %s39, %s41
      %p48 = scmp.eq.s32.totalorder %s24, 3
      %p49 = por %p47, %p48
      %p50 = scmp.ne.s32.totalorder %s41, %s42
      %p51 = scmp.eq.s32.totalorder %s24, 0
      %p52 = por %p50, %p51
      %p53 = scmp.ne.s32.totalorder %s41, %s42
      %p54 = scmp.eq.s32.totalorder %s25, 3
      %p55 = por %p53, %p54
      %p57 = scmp.ne.s32.totalorder %s42, %s56
      %p58 = scmp.eq.s32.totalorder %s25, 0
      %p59 = por %p57, %p58
      %s60 = ssub.s32 %s27, %s34
      %p61 = scmp.eq.s32.totalorder %s60, 0
      %s63 = sadd.s32 %s62, 1
      %s64 = scalar_select %p61, %s62, %s63
      %p67 = pneg %p61
      %p68 = scmp.eq.s32.totalorder %s19, 3
      %p69 = por %p67, %p68
      %p70 = scmp.ne.s32.totalorder %s62, %s65
      %p71 = scmp.eq.s32.totalorder %s19, 0
      %p72 = por %p70, %p71
      %p73 = scmp.ne.s32.totalorder %s62, %s65
      %p74 = scmp.eq.s32.totalorder %s24, 3
      %p75 = por %p73, %p74
      %p76 = scmp.ne.s32.totalorder %s65, %s66
      %p77 = scmp.eq.s32.totalorder %s24, 0
      %p78 = por %p76, %p77
      %p79 = scmp.ne.s32.totalorder %s65, %s66
      %p80 = scmp.eq.s32.totalorder %s25, 3
      %p81 = por %p79, %p80
      %p83 = scmp.ne.s32.totalorder %s66, %s82
      %p84 = scmp.eq.s32.totalorder %s25, 0
      %p85 = por %p83, %p84
      %s86 = ssub.s32 %s26, %s38
      %s87 = ssub.s32 %s27, %s34
      %s88 = sor.u32 %s86, %s87
      %p89 = scmp.eq.s32.totalorder %s88, 0
      %s91 = sadd.s32 %s90, 1
      %s92 = scalar_select %p89, %s90, %s91
      %p95 = pneg %p89
      %p96 = scmp.eq.s32.totalorder %s19, 3
      %p97 = por %p95, %p96
      %p98 = scmp.ne.s32.totalorder %s90, %s93
      %p99 = scmp.eq.s32.totalorder %s19, 0
      %p100 = por %p98, %p99
      %p101 = scmp.ne.s32.totalorder %s90, %s93
      %p102 = scmp.eq.s32.totalorder %s24, 3
      %p103 = por %p101, %p102
      %p104 = scmp.ne.s32.totalorder %s93, %s94
      %p105 = scmp.eq.s32.totalorder %s24, 0
      %p106 = por %p104, %p105
      %p107 = scmp.ne.s32.totalorder %s93, %s94
      %p108 = scmp.eq.s32.totalorder %s25, 3
      %p109 = por %p107, %p108
      %p111 = scmp.ne.s32.totalorder %s94, %s110
      %p112 = scmp.eq.s32.totalorder %s25, 0
      %p113 = por %p111, %p112
      %s115 = sadd.s32 %s114, 1
      %p118 = scmp.eq.s32.totalorder %s19, 3
      %p119 = scmp.ne.s32.totalorder %s114, %s116
      %p120 = scmp.eq.s32.totalorder %s19, 0
      %p121 = por %p119, %p120
      %p122 = scmp.ne.s32.totalorder %s114, %s116
      %p123 = scmp.eq.s32.totalorder %s24, 3
      %p124 = por %p122, %p123
      %p125 = scmp.ne.s32.totalorder %s116, %s117
      %p126 = scmp.eq.s32.totalorder %s24, 0
      %p127 = por %p125, %p126
      %p128 = scmp.ne.s32.totalorder %s116, %s117
      %p129 = scmp.eq.s32.totalorder %s25, 3
      %p130 = por %p128, %p129
      %p132 = scmp.ne.s32.totalorder %s117, %s131
      %p133 = scmp.eq.s32.totalorder %s25, 0
      %p134 = por %p132, %p133
      %s136 = sadd.s32 %s135, 1
      %p139 = scmp.eq.s32.totalorder %s19, 3
      %p140 = scmp.ne.s32.totalorder %s135, %s137
      %p141 = scmp.eq.s32.totalorder %s19, 0
      %p142 = por %p140, %p141
      %p143 = scmp.ne.s32.totalorder %s135, %s137
      %p144 = scmp.eq.s32.totalorder %s24, 3
      %p145 = por %p143, %p144
      %p146 = scmp.ne.s32.totalorder %s137, %s138
      %p147 = scmp.eq.s32.totalorder %s24, 0
      %p148 = por %p146, %p147
      %p149 = scmp.ne.s32.totalorder %s137, %s138
      %p150 = scmp.eq.s32.totalorder %s25, 3
      %p151 = por %p149, %p150
      %p153 = scmp.ne.s32.totalorder %s138, %s152
      %p154 = scmp.eq.s32.totalorder %s25, 0
      %p155 = por %p153, %p154
      %s157 = sadd.s32 %s156, 1
      %p160 = scmp.eq.s32.totalorder %s19, 3
      %p161 = scmp.ne.s32.totalorder %s156, %s158
      %p162 = scmp.eq.s32.totalorder %s19, 0
      %p163 = por %p161, %p162
      %p164 = scmp.ne.s32.totalorder %s156, %s158
      %p165 = scmp.eq.s32.totalorder %s24, 3
      %p166 = por %p164, %p165
      %p167 = scmp.ne.s32.totalorder %s158, %s159
      %p168 = scmp.eq.s32.totalorder %s24, 0
      %p169 = por %p167, %p168
      %p170 = scmp.ne.s32.totalorder %s158, %s159
      %p171 = scmp.eq.s32.totalorder %s25, 3
      %p172 = por %p170, %p171
      %p174 = scmp.ne.s32.totalorder %s159, %s173
      %p175 = scmp.eq.s32.totalorder %s25, 0
      %p176 = por %p174, %p175
      %s178 = sadd.s32 %s177, 1
      %p181 = scmp.eq.s32.totalorder %s19, 3
      %p182 = scmp.ne.s32.totalorder %s177, %s179
      %p183 = scmp.eq.s32.totalorder %s19, 0
      %p184 = por %p182, %p183
      %p185 = scmp.ne.s32.totalorder %s177, %s179
      %p186 = scmp.eq.s32.totalorder %s24, 3
      %p187 = por %p185, %p186
      %p188 = scmp.ne.s32.totalorder %s179, %s180
      %p189 = scmp.eq.s32.totalorder %s24, 0
      %p190 = por %p188, %p189
      %p191 = scmp.ne.s32.totalorder %s179, %s180
      %p192 = scmp.eq.s32.totalorder %s25, 3
      %p193 = por %p191, %p192
      %p195 = scmp.ne.s32.totalorder %s180, %s194
      %p196 = scmp.eq.s32.totalorder %s25, 0
      %p197 = por %p195, %p196
      %s198 = ssub.s32 %s26, %s38
      %s199 = ssub.s32 %s27, %s34
      %s200 = sor.u32 %s198, %s199
      %p201 = scmp.eq.s32.totalorder %s200, 0
      %s203 = sadd.s32 %s202, 1
      %s204 = scalar_select %p201, %s202, %s203
      %p207 = pneg %p201
      %p208 = scmp.eq.s32.totalorder %s19, 3
      %p209 = por %p207, %p208
      %p210 = scmp.ne.s32.totalorder %s202, %s205
      %p211 = scmp.eq.s32.totalorder %s19, 0
      %p212 = por %p210, %p211
      %p213 = scmp.ne.s32.totalorder %s202, %s205
      %p214 = scmp.eq.s32.totalorder %s24, 3
      %p215 = por %p213, %p214
      %p216 = scmp.ne.s32.totalorder %s205, %s206
      %p217 = scmp.eq.s32.totalorder %s24, 0
      %p218 = por %p216, %p217
      %p219 = scmp.ne.s32.totalorder %s205, %s206
      %p220 = scmp.eq.s32.totalorder %s25, 3
      %p221 = por %p219, %p220
      %p223 = scmp.ne.s32.totalorder %s206, %s222
      %p224 = scmp.eq.s32.totalorder %s25, 0
      %p225 = por %p223, %p224
      %p226 = scmp.le.s32.totalorder 1, %s19
      %p227 = scmp.lt.s32.totalorder %s19, 5
      %p228 = pnand %p226, %p227
      %p229 = pneg %p228
      // Predicated region
      $region9: #{tpu_custom_call.1} parent=5 // pred_check
        _
      $region10: #{tpu_custom_call.1} parent=5 // pred_check_branch
        %231 = sbr.rel (%p228) target = $region12
      $region11: #{tpu_custom_call.1} parent=5 // pred_region
        %s232 = ssub.s32 %s19, 1
        // Predicated region
        $region13: #{tpu_custom_call.1} parent=11 // pred_check
          %p233 = pneg %p52
        $region14: #{tpu_custom_call.1} parent=11 // pred_check_branch
          %235 = sbr.rel (%p233) target = $region16
        $region15: #{tpu_custom_call.1} parent=11 // pred_region
          _
        $region16: #{tpu_custom_call.1} parent=11 // pred_fallthru
          _
        // Predicated region
        $region17: #{tpu_custom_call.1} parent=11 // pred_check
          %p236 = pneg %p127
        $region18: #{tpu_custom_call.1} parent=11 // pred_check_branch
          %238 = sbr.rel (%p236) target = $region20
        $region19: #{tpu_custom_call.1} parent=11 // pred_region
          _
        $region20: #{tpu_custom_call.1} parent=11 // pred_fallthru
          _
        // Predicated region
        $region21: #{tpu_custom_call.1} parent=11 // pred_check
          %p239 = pneg %p148
        $region22: #{tpu_custom_call.1} parent=11 // pred_check_branch
          %241 = sbr.rel (%p239) target = $region24
        $region23: #{tpu_custom_call.1} parent=11 // pred_region
          _
        $region24: #{tpu_custom_call.1} parent=11 // pred_fallthru
          _
        // Predicated region
        $region25: #{tpu_custom_call.1} parent=11 // pred_check
          %p242 = pneg %p169
        $region26: #{tpu_custom_call.1} parent=11 // pred_check_branch
          %244 = sbr.rel (%p242) target = $region28
        $region27: #{tpu_custom_call.1} parent=11 // pred_region
          _
        $region28: #{tpu_custom_call.1} parent=11 // pred_fallthru
          _
        // Predicated region
        $region29: #{tpu_custom_call.1} parent=11 // pred_check
          %p245 = pneg %p190
        $region30: #{tpu_custom_call.1} parent=11 // pred_check_branch
          %247 = sbr.rel (%p245) target = $region32
        $region31: #{tpu_custom_call.1} parent=11 // pred_region
          _
        $region32: #{tpu_custom_call.1} parent=11 // pred_fallthru
          _
      $region12: #{tpu_custom_call.1} parent=5 // pred_fallthru
        _
      %p248 = scmp.lt.s32.totalorder %s19, 4
      // Predicated region
      $region33: #{tpu_custom_call.1} parent=5 // pred_check
        %p249 = pneg %p248
      $region34: #{tpu_custom_call.1} parent=5 // pred_check_branch
        %251 = sbr.rel (%p249) target = $region36
      $region35: #{tpu_custom_call.1} parent=5 // pred_region
        // Predicated region
        $region37: #{tpu_custom_call.1} parent=35 // pred_check
          %p252 = pneg %p72
        $region38: #{tpu_custom_call.1} parent=35 // pred_check_branch
          %254 = sbr.rel (%p252) target = $region40
        $region39: #{tpu_custom_call.1} parent=35 // pred_region
          %p255 = scmp.lt.s32.totalorder %s27, 1
          %s256 = scalar_select %p255, %s27, 1
          %s257 = smul.addr %s256, 2
          %s258 = scalar_lea.vmem %s1, %s257
        $region40: #{tpu_custom_call.1} parent=35 // pred_fallthru
          _
        // Predicated region
        $region41: #{tpu_custom_call.1} parent=35 // pred_check
          %p259 = pneg %p100
        $region42: #{tpu_custom_call.1} parent=35 // pred_check_branch
          %261 = sbr.rel (%p259) target = $region44
        $region43: #{tpu_custom_call.1} parent=35 // pred_region
          %s262 = sand.u32 %s90, 1
          %s263 = scalar_lea.sflag [#allocation3], %s262
          %s264 = sand.u32 %s90, 1
          %s265 = smul.addr %s264, 64
          %s266 = scalar_lea.vmem [#allocation2], %s265
          %s268 = ssub.s32 1024, 1024
          %269 = vsyncadd %s263, %s268
          %s270 = smul.addr %s27, 16
          %s271 = smul.addr %s26, 32
          %s272 = sadd.s32 %s270, %s271
          %s273 = smul.addr %s272, 64
          %s274 = scalar_lea.hbm %s2, %s273
          %s275 = sshll.u32 %s266, 4
          %s276 = int_to_ptr.vmem [resolvable:$true] %s275
          %281 = dma.hbm_to_vmem [thread:$0]  %s274, 1024, %s276, %s263, 128, 128, 8
        $region44: #{tpu_custom_call.1} parent=35 // pred_fallthru
          _
      $region36: #{tpu_custom_call.1} parent=5 // pred_fallthru
        _
      %p282 = scmp.le.s32.totalorder 1, %s19
      %p283 = scmp.lt.s32.totalorder %s19, 5
      %p284 = pnand %p282, %p283
      %p285 = pneg %p284
      // Predicated region
      $region45: #{tpu_custom_call.1} parent=5 // pred_check
        _
      $region46: #{tpu_custom_call.1} parent=5 // pred_check_branch
        %287 = sbr.rel (%p284) target = $region48
      $region47: #{tpu_custom_call.1} parent=5 // pred_region
        %s288 = ssub.s32 %s19, 1
        %s289 = sand.u32 %s93, 1
        %s290 = scalar_lea.sflag [#allocation3], %s289
        %s291 = sand.u32 %s93, 1
        %s292 = smul.addr %s291, 64
        %s293 = scalar_lea.vmem [#allocation2], %s292
        // Predicated region
        $region49: #{tpu_custom_call.1} parent=47 // pred_check
          %p294 = pneg %p106
        $region50: #{tpu_custom_call.1} parent=47 // pred_check_branch
          %296 = sbr.rel (%p294) target = $region52
        $region51: #{tpu_custom_call.1} parent=47 // pred_region
          %297 = dma.done %s290, 1024
        $region52: #{tpu_custom_call.1} parent=47 // pred_fallthru
          _
        %p298 = pneg %p52
        %p299 = pneg %p49
        %p300 = scmp.lt.s32.totalorder %s29, 1
        %s301 = scalar_select %p300, %s29, 1
        %s302 = smul.addr %s301, 2
        %s303 = scalar_lea.vmem %s1, %s302
        %p304 = pneg %p78
        %p305 = pneg %p75
        %s306 = sand.u32 %s93, 1
        %s307 = scalar_lea.sflag [#allocation3], %s306
        %s308 = sand.u32 %s93, 1
        %s309 = smul.addr %s308, 64
        %s310 = scalar_lea.vmem [#allocation2], %s309
        %p311 = pneg %p106
        %p312 = pneg %p103
        %p313 = pneg %p127
        %p314 = pneg %p124
        %p315 = pneg %p148
        %p316 = pneg %p145
        %p317 = pneg %p169
        %p318 = pneg %p166
        %p319 = pneg %p190
        %p320 = pneg %p187
        %p321 = pneg %p218
        %p322 = pneg %p215
        %s323 = sand.u32 %s205, 1
        %s324 = scalar_lea.sflag [#allocation4], %s323
        %s325 = sand.u32 %s205, 1
        %s326 = smul.addr %s325, 8
        %s327 = scalar_lea.vmem [#allocation5], %s326
        %p328 = scmp.lt.s32.totalorder %s29, 1
        %s329 = scalar_select %p328, %s29, 1
        %s330 = smul.addr %s329, 2
        %s331 = scalar_lea.vmem %s1, %s330
        %v333 = vld [vmem:[%s293] sm:$0xff]
        %v334 = vld [vmem:[%s293 + $0x8] sm:$0xff]
        %s335 = scalar_lea.vmem %s293, 16 [#allocation2]
        %v336 = vld [vmem:[%s335] sm:$0xff]
        %v337 = vld [vmem:[%s335 + $0x8] sm:$0xff]
        %v338 = vmax.bf16 %v333, %v336
        %v339 = vmax.bf16 %v334, %v337
        %s340 = scalar_lea.vmem %s293, 32 [#allocation2]
        %v341 = vld [vmem:[%s340] sm:$0xff]
        %v342 = vld [vmem:[%s340 + $0x8] sm:$0xff]
        %s343 = scalar_lea.vmem %s293, 48 [#allocation2]
        %v344 = vld [vmem:[%s343] sm:$0xff]
        %v345 = vld [vmem:[%s343 + $0x8] sm:$0xff]
        %v346 = vmax.bf16 %v341, %v344
        %v347 = vmax.bf16 %v342, %v345
        %v348 = vmax.bf16 %v338, %v346
        %v349 = vmax.bf16 %v339, %v347
        %v350 = vld [vmem:[%s0] sm:$0x3]
        %s351 = scalar_lea.vmem %s0, 2
        %v352 = vld [vmem:[%s351] sm:$0x3]
        %v355 = vunpack.c.l.b16 %v348
        %v356 = vunpack.c.h.b16 %v348
        %v357 = vunpack.c.l.b16 %v349
        %v358 = vunpack.c.h.b16 %v349
        %v359 = vpack.c.b16 %v357, %v355
        %v360 = vpack.c.b16 %v358, %v356
        %361 = vrot.lane.b32.xlu0 %v359, 17
        %v362 = vpop.permute.xlu0 %361
        %363 = vrot.lane.b32.xlu0 %v360, 17
        %v364 = vpop.permute.xlu0 %363
        %vm365 = vcmask 138240
        %v366 = vsel %vm365, %v362, %v364
        %vm368 = vcmask 138240
        %v371 = vsel %vm368, 0, %v362
        %v375 = vunpack.c.l.s4 1966171168
        %v376 = vunpack.c.0.s8 %v375
        %v377 = vlaneseq
        %v378 = vshrl.u32 %v377, 7
        %v379 = vsub.s32 %v376, %v378
        %v380 = vrot.slane %v350, %v379
        %v381 = vcombine.high %v380, %v380
        %v383 = vunpack.c.l.s4 1966171168
        %v384 = vunpack.c.0.s8 %v383
        %v385 = vlaneseq
        %v386 = vshrl.u32 %v385, 7
        %v387 = vsub.s32 %v384, %v386
        %v388 = vrot.slane %v380, %v387
        %v390 = vunpack.c.l.s4 1966171168
        %v391 = vunpack.c.0.s8 %v390
        %v392 = vlaneseq
        %v393 = vshrl.u32 %v392, 7
        %v394 = vsub.s32 %v391, %v393
        %v395 = vrot.slane %v381, %v394
        %v397 = vpack.i.b16 %v388, %v388
        %v399 = vlaneseq
        %v400 = vshrl.u32 %v399, 7
        %v401 = vsub.s32 0, %v400
        %v402 = vrot.slane %v397, %v401
        %v404 = vpack.i.b16 %v395, %v395
        %v406 = vlaneseq
        %v407 = vshrl.u32 %v406, 7
        %v408 = vsub.s32 0, %v407
        %v409 = vrot.slane %v404, %v408
        %v410 = vmul.bf16 %v371, %v402
        %v411 = vmul.bf16 %v366, %v409
        %412 = vrot.lane.b32.xlu0 %v359, 16
        %v413 = vpop.permute.xlu0 %412
        %414 = vrot.lane.b32.xlu0 %v360, 16
        %v415 = vpop.permute.xlu0 %414
        %vm416 = vcmask 130048
        %v417 = vsel %vm416, %v413, %v415
        %vm419 = vcmask 130048
        %v421 = vsel %vm419, 0, %v413
        %423 = vrot.lane.b32.xlu0 %v359, 15
        %v424 = vpop.permute.xlu0 %423
        %425 = vrot.lane.b32.xlu0 %v360, 15
        %v426 = vpop.permute.xlu0 %425
        %vm427 = vcmask 121856
        %v428 = vsel %vm427, %v424, %v426
        %vm430 = vcmask 121856
        %v432 = vsel %vm430, 0, %v424
        %v436 = vunpack.c.l.s4 1966171168
        %v437 = vunpack.c.0.s8 %v436
        %v438 = vlaneseq
        %v439 = vshrl.u32 %v438, 7
        %v440 = vsub.s32 %v437, %v439
        %v441 = vrot.slane %v352, %v440
        %v442 = vcombine.high %v441, %v441
        %v444 = vunpack.c.l.s4 1966171168
        %v445 = vunpack.c.0.s8 %v444
        %v446 = vlaneseq
        %v447 = vshrl.u32 %v446, 7
        %v448 = vsub.s32 %v445, %v447
        %v449 = vrot.slane %v441, %v448
        %v451 = vunpack.c.l.s4 1966171168
        %v452 = vunpack.c.0.s8 %v451
        %v453 = vlaneseq
        %v454 = vshrl.u32 %v453, 7
        %v455 = vsub.s32 %v452, %v454
        %v456 = vrot.slane %v442, %v455
        %v458 = vpack.i.b16 %v449, %v449
        %v460 = vlaneseq
        %v461 = vshrl.u32 %v460, 7
        %v462 = vsub.s32 0, %v461
        %v463 = vrot.slane %v458, %v462
        %v465 = vpack.i.b16 %v456, %v456
        %v467 = vlaneseq
        %v468 = vshrl.u32 %v467, 7
        %v469 = vsub.s32 0, %v468
        %v470 = vrot.slane %v465, %v469
        %v471 = vmul.bf16 %v432, %v463
        %v472 = vmul.bf16 %v428, %v470
        %473 = vrot.lane.b32.xlu0 %v359, 1
        %v474 = vpop.permute.xlu0 %473
        %475 = vrot.lane.b32.xlu0 %v360, 1
        %v476 = vpop.permute.xlu0 %475
        %vm477 = vcmask 7168
        %v478 = vsel %vm477, %v474, %v476
        %vm480 = vcmask 7168
        %v482 = vsel %vm480, 0, %v474
        %v484 = vmul.bf16 %v482, %v402
        %v485 = vmul.bf16 %v478, %v409
        %486 = vrot.lane.b32.xlu0 %v359, 127
        %v487 = vpop.permute.xlu0 %486
        %488 = vrot.lane.b32.xlu0 %v360, 127
        %v489 = vpop.permute.xlu0 %488
        %vm490 = vcmask 1039360
        %v491 = vsel %vm490, %v487, %v489
        %vm493 = vcmask 515072
        %v495 = vsel %vm493, %v489, 0
        %v497 = vmul.bf16 %v491, %v463
        %v498 = vmul.bf16 %v495, %v470
        %499 = vrot.lane.b32.xlu0 %v359, 113
        %v500 = vpop.permute.xlu0 %499
        %501 = vrot.lane.b32.xlu0 %v360, 113
        %v502 = vpop.permute.xlu0 %501
        %vm503 = vcmask 924672
        %v504 = vsel %vm503, %v500, %v502
        %vm506 = vcmask 400384
        %v508 = vsel %vm506, %v502, 0
        %v510 = vmul.bf16 %v504, %v402
        %v511 = vmul.bf16 %v508, %v409
        %512 = vrot.lane.b32.xlu0 %v359, 112
        %v513 = vpop.permute.xlu0 %512
        %514 = vrot.lane.b32.xlu0 %v360, 112
        %v515 = vpop.permute.xlu0 %514
        %vm516 = vcmask 916480
        %v517 = vsel %vm516, %v513, %v515
        %vm519 = vcmask 392192
        %v521 = vsel %vm519, %v515, 0
        %523 = vrot.lane.b32.xlu0 %v359, 111
        %v524 = vpop.permute.xlu0 %523
        %525 = vrot.lane.b32.xlu0 %v360, 111
        %v526 = vpop.permute.xlu0 %525
        %vm527 = vcmask 908288
        %v528 = vsel %vm527, %v524, %v526
        %vm530 = vcmask 384000
        %v532 = vsel %vm530, %v526, 0
        %v534 = vmul.bf16 %v528, %v463
        %v535 = vmul.bf16 %v532, %v470
        %v538 = vld [vmem:[%s3] sm:$0xff]
        %v539 = vld [vmem:[%s3 + $0x8] sm:$0xff]
        %v540 = vld [vmem:[%s4] sm:$0xff]
        %v541 = vld [vmem:[%s4 + $0x8] sm:$0xff]
        %543 = vset.pattern.permute.xlu0 0
        %544 = vperm.xlu0 %543, %v540
        %v545 = vpop.permute.xlu0 %544
        %548 = vset.pattern.permute.xlu0 0
        %549 = vperm.xlu0 %548, %v541
        %v550 = vpop.permute.xlu0 %549
        %v554 = vunpack.c.l.b16 %v538
        %v555 = vunpack.c.h.b16 %v538
        %v556 = vunpack.c.l.b16 %v539
        %v557 = vunpack.c.h.b16 %v539
        %v558 = vpack.c.b16 %v556, %v554
        %v559 = vpack.c.b16 %v557, %v555
        %v562 = vsel %vm419, %v559, 0
        %564 = vmatprep.subr.bf16.mxu0 %v411
        %565 = vmatpush1.bf16.msra.mxu0 %v410
        %566 = vmatprep.subr.bf16.mxu0 %v417
        %567 = vmatpush1.bf16.msra.mxu0 %v421
        %568 = vmatprep.subr.bf16.mxu0 %v472
        %569 = vmatpush1.bf16.msra.mxu0 %v471
        %570 = vmatprep.subr.bf16.mxu0 %v485
        %571 = vmatpush1.bf16.msra.mxu0 %v484
        %572 = vmatprep.subr.bf16.mxu0 %v360
        %573 = vmatpush1.bf16.msra.mxu0 %v359
        %574 = vmatprep.subr.bf16.mxu0 %v498
        %575 = vmatpush1.bf16.msra.mxu0 %v497
        %576 = vmatprep.subr.bf16.mxu0 %v511
        %577 = vmatpush1.bf16.msra.mxu0 %v510
        %578 = vmatprep.subr.bf16.mxu0 %v521
        %579 = vmatpush1.bf16.msra.mxu0 %v517
        %580 = vmatprep.subr.bf16.mxu0 %v535
        %581 = vmatpush1.bf16.msra.mxu0 %v534
        %582 = vmatprep.subr.bf16.mxu0 0
        %583 = vmatpush1.bf16.msra.mxu0 0
        %584 = vmatprep.subr.bf16.mxu0 0
        %585 = vmatpush1.bf16.msra.mxu0 0
        %586 = vmatprep.subr.bf16.mxu0 0
        %587 = vmatpush1.bf16.msra.mxu0 0
        %588 = vmatprep.subr.bf16.mxu0 0
        %589 = vmatpush1.bf16.msra.mxu0 0
        %590 = vmatprep.subr.bf16.mxu0 0
        %591 = vmatpush1.bf16.msra.mxu0 0
        %592 = vmatprep.subr.bf16.mxu0 0
        %593 = vmatpush1.bf16.msra.mxu0 0
        %594 = vmatprep.subr.bf16.mxu0 0
        %595 = vmatpush1.bf16.msra.mxu0 0
        %596 = vmatprep.mubr.bf16.mxu0 %v562
        %597 = vmatmul.mubr.bf16.gmra.mrb[0].mxu0 %v558
        %v598 = vpop.f32.mrb[0].mxu0
        %v599 = vadd.f32 %v545, %v598
        %v600 = vpop.f32.mrb[0].mxu0
        %v601 = vadd.f32 %v545, %v600
        %v602 = vpop.f32.mrb[0].mxu0
        %v603 = vadd.f32 %v550, %v602
        %v604 = vpop.f32.mrb[0].mxu0
        %v605 = vadd.f32 %v550, %v604
        %606 = vdwg.mxu0
        %v607 = vmax.f32 %v599, 0.0
        %v608 = vmax.f32 %v601, 0.0
        %v609 = vmax.f32 %v603, 0.0
        %v610 = vmax.f32 %v605, 0.0
        %v611 = vpack.c.bf16 %v609, %v607
        %v612 = vpack.c.bf16 %v610, %v608
        %v613 = vld [vmem:[%s331] sm:$0x3]
        %v616 = vunpack.c.l.s4 1966171168
        %v617 = vunpack.c.0.s8 %v616
        %v618 = vlaneseq
        %v619 = vshrl.u32 %v618, 7
        %v620 = vsub.s32 %v617, %v619
        %v621 = vrot.slane %v613, %v620
        %v622 = vcombine.high %v621, %v621
        %v624 = vunpack.c.l.s4 1966171168
        %v625 = vunpack.c.0.s8 %v624
        %v626 = vlaneseq
        %v627 = vshrl.u32 %v626, 7
        %v628 = vsub.s32 %v625, %v627
        %v629 = vrot.slane %v621, %v628
        %v631 = vunpack.c.l.s4 1966171168
        %v632 = vunpack.c.0.s8 %v631
        %v633 = vlaneseq
        %v634 = vshrl.u32 %v633, 7
        %v635 = vsub.s32 %v632, %v634
        %v636 = vrot.slane %v622, %v635
        %v638 = vpack.i.b16 %v629, %v629
        %v640 = vlaneseq
        %v641 = vshrl.u32 %v640, 7
        %v642 = vsub.s32 0, %v641
        %v643 = vrot.slane %v638, %v642
        %v645 = vpack.i.b16 %v636, %v636
        %v647 = vlaneseq
        %v648 = vshrl.u32 %v647, 7
        %v649 = vsub.s32 0, %v648
        %v650 = vrot.slane %v645, %v649
        %v651 = vmul.bf16 %v611, %v643
        %v652 = vmul.bf16 %v612, %v650
        %655 = vrot.lane.b32.xlu0 %v651, 17
        %v656 = vpop.permute.xlu0 %655
        %657 = vrot.lane.b32.xlu0 %v652, 17
        %v658 = vpop.permute.xlu0 %657
        %v659 = vsel %vm365, %v656, %v658
        %v662 = vsel %vm368, 0, %v656
        %v664 = vmul.bf16 %v662, %v402
        %v665 = vmul.bf16 %v659, %v409
        %666 = vrot.lane.b32.xlu0 %v651, 16
        %v667 = vpop.permute.xlu0 %666
        %668 = vrot.lane.b32.xlu0 %v652, 16
        %v669 = vpop.permute.xlu0 %668
        %v670 = vsel %vm416, %v667, %v669
        %v673 = vsel %vm419, 0, %v667
        %675 = vrot.lane.b32.xlu0 %v651, 15
        %v676 = vpop.permute.xlu0 %675
        %677 = vrot.lane.b32.xlu0 %v652, 15
        %v678 = vpop.permute.xlu0 %677
        %v679 = vsel %vm427, %v676, %v678
        %v682 = vsel %vm430, 0, %v676
        %v684 = vmul.bf16 %v682, %v463
        %v685 = vmul.bf16 %v679, %v470
        %686 = vrot.lane.b32.xlu0 %v651, 1
        %v687 = vpop.permute.xlu0 %686
        %688 = vrot.lane.b32.xlu0 %v652, 1
        %v689 = vpop.permute.xlu0 %688
        %v690 = vsel %vm477, %v687, %v689
        %v693 = vsel %vm480, 0, %v687
        %v695 = vmul.bf16 %v693, %v402
        %v696 = vmul.bf16 %v690, %v409
        %697 = vrot.lane.b32.xlu0 %v651, 127
        %v698 = vpop.permute.xlu0 %697
        %699 = vrot.lane.b32.xlu0 %v652, 127
        %v700 = vpop.permute.xlu0 %699
        %v701 = vsel %vm490, %v698, %v700
        %v704 = vsel %vm493, %v700, 0
        %v706 = vmul.bf16 %v701, %v463
        %v707 = vmul.bf16 %v704, %v470
        %708 = vrot.lane.b32.xlu0 %v651, 113
        %v709 = vpop.permute.xlu0 %708
        %710 = vrot.lane.b32.xlu0 %v652, 113
        %v711 = vpop.permute.xlu0 %710
        %v712 = vsel %vm503, %v709, %v711
        %v715 = vsel %vm506, %v711, 0
        %v717 = vmul.bf16 %v712, %v402
        %v718 = vmul.bf16 %v715, %v409
        %719 = vrot.lane.b32.xlu0 %v651, 112
        %v720 = vpop.permute.xlu0 %719
        %721 = vrot.lane.b32.xlu0 %v652, 112
        %v722 = vpop.permute.xlu0 %721
        %v723 = vsel %vm516, %v720, %v722
        %v726 = vsel %vm519, %v722, 0
        %728 = vrot.lane.b32.xlu0 %v651, 111
        %v729 = vpop.permute.xlu0 %728
        %730 = vrot.lane.b32.xlu0 %v652, 111
        %v731 = vpop.permute.xlu0 %730
        %v732 = vsel %vm527, %v729, %v731
        %v735 = vsel %vm530, %v731, 0
        %v737 = vmul.bf16 %v732, %v463
        %v738 = vmul.bf16 %v735, %v470
        %v739 = vld [vmem:[%s5] sm:$0xff]
        %v740 = vld [vmem:[%s6] sm:$0xff]
        %742 = vset.pattern.permute.xlu0 0
        %743 = vperm.xlu0 %742, %v740
        %v744 = vpop.permute.xlu0 %743
        %v747 = vunpack.c.l.b16 %v739
        %v748 = vunpack.c.h.b16 %v739
        %v749 = vpack.c.b16 %v747, %v747
        %v750 = vpack.c.b16 %v748, %v748
        %v753 = vsel %vm419, %v750, 0
        %755 = vmatprep.subr.bf16.mxu0 %v665
        %756 = vmatpush1.bf16.msra.mxu0 %v664
        %757 = vmatprep.subr.bf16.mxu0 %v670
        %758 = vmatpush1.bf16.msra.mxu0 %v673
        %759 = vmatprep.subr.bf16.mxu0 %v685
        %760 = vmatpush1.bf16.msra.mxu0 %v684
        %761 = vmatprep.subr.bf16.mxu0 %v696
        %762 = vmatpush1.bf16.msra.mxu0 %v695
        %763 = vmatprep.subr.bf16.mxu0 %v652
        %764 = vmatpush1.bf16.msra.mxu0 %v651
        %765 = vmatprep.subr.bf16.mxu0 %v707
        %766 = vmatpush1.bf16.msra.mxu0 %v706
        %767 = vmatprep.subr.bf16.mxu0 %v718
        %768 = vmatpush1.bf16.msra.mxu0 %v717
        %769 = vmatprep.subr.bf16.mxu0 %v726
        %770 = vmatpush1.bf16.msra.mxu0 %v723
        %771 = vmatprep.subr.bf16.mxu0 %v738
        %772 = vmatpush1.bf16.msra.mxu0 %v737
        %773 = vmatprep.subr.bf16.mxu0 0
        %774 = vmatpush1.bf16.msra.mxu0 0
        %775 = vmatprep.subr.bf16.mxu0 0
        %776 = vmatpush1.bf16.msra.mxu0 0
        %777 = vmatprep.subr.bf16.mxu0 0
        %778 = vmatpush1.bf16.msra.mxu0 0
        %779 = vmatprep.subr.bf16.mxu0 0
        %780 = vmatpush1.bf16.msra.mxu0 0
        %781 = vmatprep.subr.bf16.mxu0 0
        %782 = vmatpush1.bf16.msra.mxu0 0
        %783 = vmatprep.subr.bf16.mxu0 0
        %784 = vmatpush1.bf16.msra.mxu0 0
        %785 = vmatprep.subr.bf16.mxu0 0
        %786 = vmatpush1.bf16.msra.mxu0 0
        %787 = vmatprep.mubr.bf16.mxu0 %v753
        %788 = vmatmul.mubr.bf16.gmra.mrb[0].mxu0 %v749
        %v789 = vpop.f32.mrb[0].mxu0
        %v790 = vadd.f32 %v744, %v789
        %v791 = vpop.f32.mrb[0].mxu0
        %v792 = vadd.f32 %v744, %v791
        %v793 = vpop.f32.mrb[0].mxu0
        %v794 = vpop.f32.mrb[0].mxu0
        %795 = vdwg.mxu0
        %v796 = vmax.f32 %v790, 0.0
        %v797 = vmax.f32 %v792, 0.0
        %800 = vrot.lane.b32.xlu0 %v796, 96
        %v801 = vpop.permute.xlu0 %800
        %802 = vrot.lane.b32.xlu0 %v797, 96
        %v803 = vpop.permute.xlu0 %802
        %vm804 = vcmask 785408
        %v805 = vsel %vm804, %v801, %v803
        %807 = vst [vmem:[%s327] sm:$0xff] %v805
        %s808 = sand.u32 %s205, 1
        %s809 = scalar_lea.sflag [#allocation4], %s808
        %s810 = sand.u32 %s205, 1
        %s811 = smul.addr %s810, 8
        %s812 = scalar_lea.vmem [#allocation5], %s811
        // Predicated region
        $region53: #{tpu_custom_call.1} parent=47 // pred_check
          %p813 = pneg %p215
        $region54: #{tpu_custom_call.1} parent=47 // pred_check_branch
          %815 = sbr.rel (%p813) target = $region56
        $region55: #{tpu_custom_call.1} parent=47 // pred_region
          %s817 = ssub.s32 128, 128
          %818 = vsyncadd %s809, %s817
          %s819 = smul.addr %s28, 2
          %s820 = sadd.s32 %s29, %s819
          %s821 = smul.addr %s820, 128
          %s822 = scalar_lea.hbm %s7, %s821
          %s824 = sshll.u32 %s812, 4
          %s825 = int_to_ptr.vmem [resolvable:$true] %s824
          %827 = dma.vmem_to_hbm [thread:$0]  %s825, 128, %s822, %s809
        $region56: #{tpu_custom_call.1} parent=47 // pred_fallthru
          _
      $region48: #{tpu_custom_call.1} parent=5 // pred_fallthru
        _
      %p828 = scmp.le.s32.totalorder 2, %s19
      // Predicated region
      $region57: #{tpu_custom_call.1} parent=5 // pred_check
        %p829 = pneg %p828
      $region58: #{tpu_custom_call.1} parent=5 // pred_check_branch
        %831 = sbr.rel (%p829) target = $region60
      $region59: #{tpu_custom_call.1} parent=5 // pred_region
        %s832 = ssub.s32 %s19, 2
        // Predicated region
        $region61: #{tpu_custom_call.1} parent=59 // pred_check
          %p833 = pneg %p221
        $region62: #{tpu_custom_call.1} parent=59 // pred_check_branch
          %835 = sbr.rel (%p833) target = $region64
        $region63: #{tpu_custom_call.1} parent=59 // pred_region
          %s836 = sand.u32 %s206, 1
          %s837 = scalar_lea.sflag [#allocation4], %s836
          %s838 = sand.u32 %s206, 1
          %s839 = smul.addr %s838, 8
          %s840 = scalar_lea.vmem [#allocation5], %s839
          %841 = dma.done %s837, 128
        $region64: #{tpu_custom_call.1} parent=59 // pred_fallthru
          _
      $region60: #{tpu_custom_call.1} parent=5 // pred_fallthru
        _
    $region6: #{tpu_custom_call.1} parent=1 // loop_footer
      %s23 = sadd.s32 1, %s19
    $region7: #{tpu_custom_call.1} parent=1 // loop_footer_branch
      %18 = sbr.rel target = $region3
    $region8: #{tpu_custom_call.1} parent=1 // loop_exit
      _
    %842 = vsyncpa [#allocation3], 1
    %s843 = scalar_lea.sflag [#allocation3], 1
    %844 = vsyncpa %s843, 1
    %845 = vsyncpa [#allocation4], 1
    %s846 = scalar_lea.sflag [#allocation4], 1
    %847 = vsyncpa %s846, 1

</llo_original>
